<compile_context>
chip_gen: v7x
topology: tpu7x:2x2x1
jax: 0.10.0
libtpu: 0.0.40
codegen_flags: <defaults>
</compile_context>

<pallas_src>
import jax
import jax.numpy as jnp
from jax.experimental import pallas as pl
from jax.experimental.pallas import tpu as pltpu

IMG = 28 * 28          # 784 pixels per image
NUM_CLASSES = 10       # condition / label size
LATENT = 4             # self.latent_dim = 4
HIDDEN = 128           # MLP hidden width (lane-aligned)


def _cvae_kernel(x_ref, eps_ref, enc_lab_ref, dec_lab_ref,
                 ew1_ref, eb1_ref, ehw_ref, ehb_ref,
                 dw1z_ref, db1_ref, dw2_ref, db2_ref,
                 pic_ref, musig_ref):
    """Fused encoder + reparameterization + decoder for one batch tile."""
    # ---------------- encoder ----------------
    # h = relu(img @ W_img + onehot(label) @ W_lab + b); label term is pre-gathered rows.
    h = jnp.dot(x_ref[...], ew1_ref[...], preferred_element_type=jnp.float32)
    h = jnp.maximum(h + enc_lab_ref[...] + eb1_ref[...], 0.0)

    # fused (mu || log_sigma) head: one [128, 8] matmul instead of two [128, 4] ones
    heads = jnp.dot(h, ehw_ref[...], preferred_element_type=jnp.float32) + ehb_ref[...]
    mu = heads[:, :LATENT]
    sigma = jnp.exp(heads[:, LATENT:])                       # positive scale

    # --------- reparameterize + decoder ---------
    z = mu + sigma * eps_ref[...]                            # [Bt, 4]
    d = jnp.dot(z, dw1z_ref[...], preferred_element_type=jnp.float32)
    d = jnp.maximum(d + dec_lab_ref[...] + db1_ref[...], 0.0)

    logits = jnp.dot(d.astype(jnp.bfloat16), dw2_ref[...],
                     preferred_element_type=jnp.float32) + db2_ref[...]
    pic_ref[...] = jax.nn.sigmoid(logits)                    # [Bt, 784] f32
    musig_ref[...] = jnp.concatenate([mu, sigma], axis=-1)   # lane-dense packed [Bt, 8]


def init_params(key):
    ks = jax.random.split(key, 6)
    s = 0.05
    return {
        # encoder first layer, split into image and label parts (big weight in bf16)
        "ew1_img": (s * jax.random.normal(ks[0], (IMG, HIDDEN), jnp.float32)
                    ).astype(jnp.bfloat16),
        "ew1_lab": s * jax.random.normal(ks[1], (NUM_CLASSES, HIDDEN), jnp.float32),
        "eb1":     jnp.zeros((1, HIDDEN), jnp.float32),
        # fused (mu || log_sigma) head
        "ehead_w": s * jax.random.normal(ks[2], (HIDDEN, 2 * LATENT), jnp.float32),
        "ehead_b": jnp.zeros((1, 2 * LATENT), jnp.float32),
        # decoder first layer, split into z and label parts
        "dw1_z":   s * jax.random.normal(ks[3], (LATENT, HIDDEN), jnp.float32),
        "dw1_lab": s * jax.random.normal(ks[4], (NUM_CLASSES, HIDDEN), jnp.float32),
        "db1":     jnp.zeros((1, HIDDEN), jnp.float32),
        # decoder output layer (big weight in bf16)
        "dw2":     (s * jax.random.normal(ks[5], (HIDDEN, IMG), jnp.float32)
                    ).astype(jnp.bfloat16),
        "db2":     jnp.zeros((1, IMG), jnp.float32),
    }


def _round_up(n, m):
    return ((n + m - 1) // m) * m


def cvae_forward(images, labels, params, eps):
    """images: [B,1,28,28] f32 (NCHW), labels: [B] int32, eps: [B,LATENT] f32."""
    assert images.shape[0] == labels.shape[0]
    B = images.shape[0]

    x = images.reshape(B, IMG).astype(jnp.bfloat16)           # bf16 halves the x stream
    # onehot(label) @ W  ==  W[label]  (row gather): removes 2 tiny matmuls + [B,10] stream
    enc_lab = params["ew1_lab"][labels]                        # [B, HIDDEN] f32
    dec_lab = params["dw1_lab"][labels]                        # [B, HIDDEN] f32
    eps = eps.astype(jnp.float32)

    # Batch tiling: 256-row M tiles feed the v6e/v7x 256-wide MXU (also fine on v5e);
    # tiny batches are just padded up to a single multiple-of-8 tile. At bt=256 the
    # double-buffered activation tiles (~2.5 MB) + resident weights (~0.4 MB) fit
    # comfortably inside even v7x's 32 MiB scoped VMEM default.
    bt = 256 if B >= 256 else _round_up(B, 8)
    Bp = _round_up(B, bt)

    def pad(a):
        if a.shape[0] == Bp:
            return a
        return jnp.concatenate(
            [a, jnp.zeros((Bp - a.shape[0],) + a.shape[1:], a.dtype)], axis=0)

    x, eps, enc_lab, dec_lab = pad(x), pad(eps), pad(enc_lab), pad(dec_lab)

    grid = (Bp // bt,)

    def row_spec(n):                                           # batch-tiled stream
        return pl.BlockSpec((bt, n), lambda i: (i, 0))

    def resident(shape):                                       # weight: same block every step
        return pl.BlockSpec(shape, lambda i: (0, 0))

    in_specs = [
        row_spec(IMG),                  # x
        row_spec(LATENT),               # eps
        row_spec(HIDDEN),               # enc_lab (gathered label rows, encoder)
        row_spec(HIDDEN),               # dec_lab (gathered label rows, decoder)
        resident((IMG, HIDDEN)),        # ew1_img  (bf16)
        resident((1, HIDDEN)),          # eb1
        resident((HIDDEN, 2 * LATENT)), # ehead_w  (mu || log_sigma)
        resident((1, 2 * LATENT)),      # ehead_b
        resident((LATENT, HIDDEN)),     # dw1_z
        resident((1, HIDDEN)),          # db1
        resident((HIDDEN, IMG)),        # dw2      (bf16)
        resident((1, IMG)),             # db2
    ]
    out_specs = (row_spec(IMG), row_spec(2 * LATENT))
    out_shapes = (
        jax.ShapeDtypeStruct((Bp, IMG), jnp.float32),          # flat picture
        jax.ShapeDtypeStruct((Bp, 2 * LATENT), jnp.float32),   # packed mu || sigma
    )

    pic_flat, musig = pl.pallas_call(
        _cvae_kernel,
        out_shape=out_shapes,
        grid=grid,
        in_specs=in_specs,
        out_specs=out_specs,
        compiler_params=pltpu.CompilerParams(
            dimension_semantics=("parallel",)),                # shard batch over v7x's 2 TCs
    )(x, eps, enc_lab, dec_lab,
      params["ew1_img"], params["eb1"], params["ehead_w"], params["ehead_b"],
      params["dw1_z"], params["db1"], params["dw2"], params["db2"])

    mu = musig[:B, :LATENT]
    sigma = musig[:B, LATENT:]
    # matches torch.reshape(picture, [mu.shape[0], 28, 28])
    return pic_flat[:B].reshape(B, 28, 28), mu, sigma


if __name__ == "__main__":
    key = jax.random.PRNGKey(0)
    k_img, k_lab, k_eps, k_par = jax.random.split(key, 4)

    B = 8
    images = jax.random.uniform(k_img, (B, 1, 28, 28), dtype=jnp.float32)   # NCHW
    labels = jax.random.randint(k_lab, (B,), 0, NUM_CLASSES)
    eps = jax.random.normal(k_eps, (B, LATENT), dtype=jnp.float32)          # Normal(0,1).sample
    params = init_params(k_par)

    picture, mu, sigma = jax.jit(cvae_forward)(images, labels, params, eps)
    jax.block_until_ready((picture, mu, sigma))

    assert picture.shape == (B, 28, 28)
    assert mu.shape == (B, LATENT)
    assert sigma.shape == (B, LATENT)
    assert bool(jnp.all(jnp.isfinite(picture)))
    assert bool(jnp.all(jnp.isfinite(sigma)))
    assert bool(jnp.all(sigma > 0))
    print("KERNEL_OK")
</pallas_src>

<mosaic_0001>
module attributes {stable_mosaic.version = 11 : i64} {
  func.func @_cvae_kernel(%arg0: i32, %arg1: memref<8x784xbf16, #tpu.memory_space<vmem>>, %arg2: memref<8x4xf32, #tpu.memory_space<vmem>>, %arg3: memref<8x128xf32, #tpu.memory_space<vmem>>, %arg4: memref<8x128xf32, #tpu.memory_space<vmem>>, %arg5: memref<784x128xbf16, #tpu.memory_space<vmem>>, %arg6: memref<1x128xf32, #tpu.memory_space<vmem>>, %arg7: memref<128x8xf32, #tpu.memory_space<vmem>>, %arg8: memref<1x8xf32, #tpu.memory_space<vmem>>, %arg9: memref<4x128xf32, #tpu.memory_space<vmem>>, %arg10: memref<1x128xf32, #tpu.memory_space<vmem>>, %arg11: memref<128x784xbf16, #tpu.memory_space<vmem>>, %arg12: memref<1x784xf32, #tpu.memory_space<vmem>>, %arg13: memref<8x784xf32, #tpu.memory_space<vmem>>, %arg14: memref<8x8xf32, #tpu.memory_space<vmem>>) attributes {dimension_semantics = [#tpu.dimension_semantics<parallel>], iteration_bounds = array<i64: 1>, scalar_prefetch = 0 : i64, scratch_operands = 0 : i64, tpu.core_type = #tpu.core_type<tc>, window_params = [{transform_indices = @transform_0, window_bounds = array<i64: 8, 784>}, {transform_indices = @transform_1, window_bounds = array<i64: 8, 4>}, {transform_indices = @transform_2, window_bounds = array<i64: 8, 128>}, {transform_indices = @transform_3, window_bounds = array<i64: 8, 128>}, {pipeline_mode = #tpu.pipeline_mode<synchronous>, transform_indices = @transform_4, window_bounds = array<i64: 784, 128>}, {pipeline_mode = #tpu.pipeline_mode<synchronous>, transform_indices = @transform_5, window_bounds = array<i64: 1, 128>}, {pipeline_mode = #tpu.pipeline_mode<synchronous>, transform_indices = @transform_6, window_bounds = array<i64: 128, 8>}, {pipeline_mode = #tpu.pipeline_mode<synchronous>, transform_indices = @transform_7, window_bounds = array<i64: 1, 8>}, {pipeline_mode = #tpu.pipeline_mode<synchronous>, transform_indices = @transform_8, window_bounds = array<i64: 4, 128>}, {pipeline_mode = #tpu.pipeline_mode<synchronous>, transform_indices = @transform_9, window_bounds = array<i64: 1, 128>}, {pipeline_mode = #tpu.pipeline_mode<synchronous>, transform_indices = @transform_10, window_bounds = array<i64: 128, 784>}, {pipeline_mode = #tpu.pipeline_mode<synchronous>, transform_indices = @transform_11, window_bounds = array<i64: 1, 784>}, {transform_indices = @transform_12, window_bounds = array<i64: 8, 784>}, {transform_indices = @transform_13, window_bounds = array<i64: 8, 8>}]} {
    %c0 = arith.constant 0 : index
    %c0_0 = arith.constant 0 : index
    %0 = vector.load %arg1[%c0, %c0_0] : memref<8x784xbf16, #tpu.memory_space<vmem>>, vector<8x784xbf16>
    %c0_1 = arith.constant 0 : index
    %c0_2 = arith.constant 0 : index
    %1 = vector.load %arg5[%c0_1, %c0_2] : memref<784x128xbf16, #tpu.memory_space<vmem>>, vector<784x128xbf16>
    %cst = arith.constant dense<0.000000e+00> : vector<8x128xf32>
    %2 = tpu.matmul %0, %1, %cst {dimension_numbers = #tpu.dot_dimension_numbers<[1], [0], [0], [1], [0, 0, 1, 1], [], []>} : vector<8x784xbf16>, vector<784x128xbf16>, vector<8x128xf32> -> vector<8x128xf32>
    %c0_3 = arith.constant 0 : index
    %c0_4 = arith.constant 0 : index
    %3 = vector.load %arg3[%c0_3, %c0_4] : memref<8x128xf32, #tpu.memory_space<vmem>>, vector<8x128xf32>
    %4 = arith.addf %2, %3 : vector<8x128xf32>
    %c0_5 = arith.constant 0 : index
    %c0_6 = arith.constant 0 : index
    %5 = vector.load %arg6[%c0_5, %c0_6] : memref<1x128xf32, #tpu.memory_space<vmem>>, vector<1x128xf32>
    %6 = vector.broadcast %5 : vector<1x128xf32> to vector<8x128xf32>
    %7 = arith.addf %4, %6 : vector<8x128xf32>
    %cst_7 = arith.constant 0.000000e+00 : f32
    %8 = vector.broadcast %cst_7 : f32 to vector<8x128xf32>
    %9 = arith.maximumf %7, %8 : vector<8x128xf32>
    %c0_8 = arith.constant 0 : index
    %c0_9 = arith.constant 0 : index
    %10 = vector.load %arg7[%c0_8, %c0_9] : memref<128x8xf32, #tpu.memory_space<vmem>>, vector<128x8xf32>
    %cst_10 = arith.constant dense<0.000000e+00> : vector<8x8xf32>
    %11 = tpu.matmul %9, %10, %cst_10 {dimension_numbers = #tpu.dot_dimension_numbers<[1], [0], [0], [1], [0, 0, 1, 1], [], []>} : vector<8x128xf32>, vector<128x8xf32>, vector<8x8xf32> -> vector<8x8xf32>
    %c0_11 = arith.constant 0 : index
    %c0_12 = arith.constant 0 : index
    %12 = vector.load %arg8[%c0_11, %c0_12] : memref<1x8xf32, #tpu.memory_space<vmem>>, vector<1x8xf32>
    %13 = vector.broadcast %12 : vector<1x8xf32> to vector<8x8xf32>
    %14 = arith.addf %11, %13 : vector<8x8xf32>
    %15 = vector.extract_strided_slice %14 {offsets = [0, 0], sizes = [8, 4], strides = [1, 1]} : vector<8x8xf32> to vector<8x4xf32>
    %16 = vector.extract_strided_slice %14 {offsets = [0, 4], sizes = [8, 4], strides = [1, 1]} : vector<8x8xf32> to vector<8x4xf32>
    %17 = math.exp %16 : vector<8x4xf32>
    %c0_13 = arith.constant 0 : index
    %c0_14 = arith.constant 0 : index
    %18 = vector.load %arg2[%c0_13, %c0_14] : memref<8x4xf32, #tpu.memory_space<vmem>>, vector<8x4xf32>
    %19 = arith.mulf %17, %18 : vector<8x4xf32>
    %20 = arith.addf %15, %19 : vector<8x4xf32>
    %c0_15 = arith.constant 0 : index
    %c0_16 = arith.constant 0 : index
    %21 = vector.load %arg9[%c0_15, %c0_16] : memref<4x128xf32, #tpu.memory_space<vmem>>, vector<4x128xf32>
    %cst_17 = arith.constant dense<0.000000e+00> : vector<8x128xf32>
    %22 = tpu.matmul %20, %21, %cst_17 {dimension_numbers = #tpu.dot_dimension_numbers<[1], [0], [0], [1], [0, 0, 1, 1], [], []>} : vector<8x4xf32>, vector<4x128xf32>, vector<8x128xf32> -> vector<8x128xf32>
    %c0_18 = arith.constant 0 : index
    %c0_19 = arith.constant 0 : index
    %23 = vector.load %arg4[%c0_18, %c0_19] : memref<8x128xf32, #tpu.memory_space<vmem>>, vector<8x128xf32>
    %24 = arith.addf %22, %23 : vector<8x128xf32>
    %c0_20 = arith.constant 0 : index
    %c0_21 = arith.constant 0 : index
    %25 = vector.load %arg10[%c0_20, %c0_21] : memref<1x128xf32, #tpu.memory_space<vmem>>, vector<1x128xf32>
    %26 = vector.broadcast %25 : vector<1x128xf32> to vector<8x128xf32>
    %27 = arith.addf %24, %26 : vector<8x128xf32>
    %cst_22 = arith.constant 0.000000e+00 : f32
    %28 = vector.broadcast %cst_22 : f32 to vector<8x128xf32>
    %29 = arith.maximumf %27, %28 : vector<8x128xf32>
    %30 = arith.truncf %29 : vector<8x128xf32> to vector<8x128xbf16>
    %c0_23 = arith.constant 0 : index
    %c0_24 = arith.constant 0 : index
    %31 = vector.load %arg11[%c0_23, %c0_24] : memref<128x784xbf16, #tpu.memory_space<vmem>>, vector<128x784xbf16>
    %cst_25 = arith.constant dense<0.000000e+00> : vector<8x784xf32>
    %32 = tpu.matmul %30, %31, %cst_25 {dimension_numbers = #tpu.dot_dimension_numbers<[1], [0], [0], [1], [0, 0, 1, 1], [], []>} : vector<8x128xbf16>, vector<128x784xbf16>, vector<8x784xf32> -> vector<8x784xf32>
    %c0_26 = arith.constant 0 : index
    %c0_27 = arith.constant 0 : index
    %33 = vector.load %arg12[%c0_26, %c0_27] : memref<1x784xf32, #tpu.memory_space<vmem>>, vector<1x784xf32>
    %34 = vector.broadcast %33 : vector<1x784xf32> to vector<8x784xf32>
    %35 = arith.addf %32, %34 : vector<8x784xf32>
    %36 = arith.negf %35 : vector<8x784xf32>
    %37 = math.exp %36 : vector<8x784xf32>
    %cst_28 = arith.constant 1.000000e+00 : f32
    %38 = vector.broadcast %cst_28 : f32 to vector<8x784xf32>
    %39 = arith.addf %38, %37 : vector<8x784xf32>
    %40 = arith.divf %38, %39 : vector<8x784xf32>
    %c0_29 = arith.constant 0 : index
    %c0_30 = arith.constant 0 : index
    %41 = vector.load %arg13[%c0_29, %c0_30] : memref<8x784xf32, #tpu.memory_space<vmem>>, vector<8x784xf32>
    tpu.vector_store %arg13[%c0_29, %c0_30], %40 {strides = array<i32>} : memref<8x784xf32, #tpu.memory_space<vmem>>, vector<8x784xf32>,
    %42 = tpu.concatenate %15, %17 in 1 : vector<8x4xf32>, vector<8x4xf32> -> vector<8x8xf32>
    %c0_31 = arith.constant 0 : index
    %c0_32 = arith.constant 0 : index
    %43 = vector.load %arg14[%c0_31, %c0_32] : memref<8x8xf32, #tpu.memory_space<vmem>>, vector<8x8xf32>
    tpu.vector_store %arg14[%c0_31, %c0_32], %42 {strides = array<i32>} : memref<8x8xf32, #tpu.memory_space<vmem>>, vector<8x8xf32>,
    return
  }
  func.func @transform_0(%arg0: i32) -> (i32, i32) {
    %c0_i32 = arith.constant 0 : i32
    %c0_i32_0 = arith.constant 0 : i32
    return %arg0, %c0_i32 : i32, i32
  }
  func.func @transform_1(%arg0: i32) -> (i32, i32) {
    %c0_i32 = arith.constant 0 : i32
    %c0_i32_0 = arith.constant 0 : i32
    return %arg0, %c0_i32 : i32, i32
  }
  func.func @transform_2(%arg0: i32) -> (i32, i32) {
    %c0_i32 = arith.constant 0 : i32
    %c0_i32_0 = arith.constant 0 : i32
    return %arg0, %c0_i32 : i32, i32
  }
  func.func @transform_3(%arg0: i32) -> (i32, i32) {
    %c0_i32 = arith.constant 0 : i32
    %c0_i32_0 = arith.constant 0 : i32
    return %arg0, %c0_i32 : i32, i32
  }
  func.func @transform_4(%arg0: i32) -> (i32, i32) {
    %c0_i32 = arith.constant 0 : i32
    %c0_i32_0 = arith.constant 0 : i32
    %c0_i32_1 = arith.constant 0 : i32
    return %c0_i32, %c0_i32_0 : i32, i32
  }
  func.func @transform_5(%arg0: i32) -> (i32, i32) {
    %c0_i32 = arith.constant 0 : i32
    %c0_i32_0 = arith.constant 0 : i32
    %c0_i32_1 = arith.constant 0 : i32
    return %c0_i32, %c0_i32_0 : i32, i32
  }
  func.func @transform_6(%arg0: i32) -> (i32, i32) {
    %c0_i32 = arith.constant 0 : i32
    %c0_i32_0 = arith.constant 0 : i32
    %c0_i32_1 = arith.constant 0 : i32
    return %c0_i32, %c0_i32_0 : i32, i32
  }
  func.func @transform_7(%arg0: i32) -> (i32, i32) {
    %c0_i32 = arith.constant 0 : i32
    %c0_i32_0 = arith.constant 0 : i32
    %c0_i32_1 = arith.constant 0 : i32
    return %c0_i32, %c0_i32_0 : i32, i32
  }
  func.func @transform_8(%arg0: i32) -> (i32, i32) {
    %c0_i32 = arith.constant 0 : i32
    %c0_i32_0 = arith.constant 0 : i32
    %c0_i32_1 = arith.constant 0 : i32
    return %c0_i32, %c0_i32_0 : i32, i32
  }
  func.func @transform_9(%arg0: i32) -> (i32, i32) {
    %c0_i32 = arith.constant 0 : i32
    %c0_i32_0 = arith.constant 0 : i32
    %c0_i32_1 = arith.constant 0 : i32
    return %c0_i32, %c0_i32_0 : i32, i32
  }
  func.func @transform_10(%arg0: i32) -> (i32, i32) {
    %c0_i32 = arith.constant 0 : i32
    %c0_i32_0 = arith.constant 0 : i32
    %c0_i32_1 = arith.constant 0 : i32
    return %c0_i32, %c0_i32_0 : i32, i32
  }
  func.func @transform_11(%arg0: i32) -> (i32, i32) {
    %c0_i32 = arith.constant 0 : i32
    %c0_i32_0 = arith.constant 0 : i32
    %c0_i32_1 = arith.constant 0 : i32
    return %c0_i32, %c0_i32_0 : i32, i32
  }
  func.func @transform_12(%arg0: i32) -> (i32, i32) {
    %c0_i32 = arith.constant 0 : i32
    %c0_i32_0 = arith.constant 0 : i32
    return %arg0, %c0_i32 : i32, i32
  }
  func.func @transform_13(%arg0: i32) -> (i32, i32) {
    %c0_i32 = arith.constant 0 : i32
    %c0_i32_0 = arith.constant 0 : i32
    return %arg0, %c0_i32 : i32, i32
  }
}

</mosaic_0001>

<llo_original>
// kernel: cvae_forward.1
$region0: #{cvae_forward.1}
  #allocation0 [shape = 'u32[]', space=smem, size = 0x4, offset = 0x4, fixed_abs, tag = 'smem constant byte address 0x4 - core index']
  #allocation1 [shape = 'u32[144,128]{1,0:T(1,128)}', space=vmem, size = 0x12000, scoped, tag = 'internal scratch']
  %s0 = inlined_call_operand.vmem [shape: bf16[8,784], index: 0, kind: input, shape index: {}]
  %s1 = inlined_call_operand.vmem [shape: f32[8,4], index: 1, kind: input, shape index: {}]
  %s2 = inlined_call_operand.vmem [shape: f32[8,128], index: 2, kind: input, shape index: {}]
  %s3 = inlined_call_operand.vmem [shape: f32[8,128], index: 3, kind: input, shape index: {}]
  %s4 = inlined_call_operand.vmem [shape: bf16[784,128], index: 4, kind: input, shape index: {}]
  %s5 = inlined_call_operand.vmem [shape: f32[1,128], index: 5, kind: input, shape index: {}]
  %s6 = inlined_call_operand.vmem [shape: f32[128,8], index: 6, kind: input, shape index: {}]
  %s7 = inlined_call_operand.vmem [shape: f32[1,8], index: 7, kind: input, shape index: {}]
  %s8 = inlined_call_operand.vmem [shape: f32[4,128], index: 8, kind: input, shape index: {}]
  %s9 = inlined_call_operand.vmem [shape: f32[1,128], index: 9, kind: input, shape index: {}]
  %s10 = inlined_call_operand.vmem [shape: bf16[128,784], index: 10, kind: input, shape index: {}]
  %s11 = inlined_call_operand.vmem [shape: f32[1,784], index: 11, kind: input, shape index: {}]
  %s12 = inlined_call_operand.vmem [shape: f32[8,784], index: 12, kind: output, shape index: {0}]
  %s13 = inlined_call_operand.vmem [shape: f32[8,8], index: 13, kind: output, shape index: {1}]
  %14 = xla_tuple %s12, %s13
  %s15 = sld [smem:[#allocation0]]
  $region66: #{cvae_forward.1} parent=0
    _
  %s17 = ssub.s32 1, %s15
  %s18 = scalar_select 0, %s17, %s15
  // Predicated region
  $region2: #{cvae_forward.1} parent=0 // pred_check
    _
  $region3: #{cvae_forward.1} parent=0 // pred_check_branch
    %20 = sbr.rel (0) target = $region5
  $region4: #{cvae_forward.1} parent=0 // pred_region
    _
  $region5: #{cvae_forward.1} parent=0 // pred_fallthru
    _
  // Predicated region
  $region6: #{cvae_forward.1} parent=0 // pred_check
    _
  $region7: #{cvae_forward.1} parent=0 // pred_check_branch
    %22 = sbr.rel (0) target = $region9
  $region8: #{cvae_forward.1} parent=0 // pred_region
    _
  $region9: #{cvae_forward.1} parent=0 // pred_fallthru
    _
  // Predicated region
  $region10: #{cvae_forward.1} parent=0 // pred_check
    _
  $region11: #{cvae_forward.1} parent=0 // pred_check_branch
    %24 = sbr.rel (0) target = $region13
  $region12: #{cvae_forward.1} parent=0 // pred_region
    _
  $region13: #{cvae_forward.1} parent=0 // pred_fallthru
    _
  // Predicated region
  $region14: #{cvae_forward.1} parent=0 // pred_check
    _
  $region15: #{cvae_forward.1} parent=0 // pred_check_branch
    %26 = sbr.rel (0) target = $region17
  $region16: #{cvae_forward.1} parent=0 // pred_region
    _
  $region17: #{cvae_forward.1} parent=0 // pred_fallthru
    _
  // Predicated region
  $region18: #{cvae_forward.1} parent=0 // pred_check
    _
  $region19: #{cvae_forward.1} parent=0 // pred_check_branch
    %28 = sbr.rel (0) target = $region21
  $region20: #{cvae_forward.1} parent=0 // pred_region
    _
  $region21: #{cvae_forward.1} parent=0 // pred_fallthru
    _
  // Predicated region
  $region22: #{cvae_forward.1} parent=0 // pred_check
    _
  $region23: #{cvae_forward.1} parent=0 // pred_check_branch
    %30 = sbr.rel (0) target = $region25
  $region24: #{cvae_forward.1} parent=0 // pred_region
    _
  $region25: #{cvae_forward.1} parent=0 // pred_fallthru
    _
  // Predicated region
  $region26: #{cvae_forward.1} parent=0 // pred_check
    _
  $region27: #{cvae_forward.1} parent=0 // pred_check_branch
    %32 = sbr.rel (0) target = $region29
  $region28: #{cvae_forward.1} parent=0 // pred_region
    _
  $region29: #{cvae_forward.1} parent=0 // pred_fallthru
    _
  // Predicated region
  $region30: #{cvae_forward.1} parent=0 // pred_check
    _
  $region31: #{cvae_forward.1} parent=0 // pred_check_branch
    %34 = sbr.rel (0) target = $region33
  $region32: #{cvae_forward.1} parent=0 // pred_region
    _
  $region33: #{cvae_forward.1} parent=0 // pred_fallthru
    _
  // Predicated region
  $region34: #{cvae_forward.1} parent=0 // pred_check
    _
  $region35: #{cvae_forward.1} parent=0 // pred_check_branch
    %36 = sbr.rel (0) target = $region37
  $region36: #{cvae_forward.1} parent=0 // pred_region
    _
  $region37: #{cvae_forward.1} parent=0 // pred_fallthru
    _
  // Predicated region
  $region38: #{cvae_forward.1} parent=0 // pred_check
    _
  $region39: #{cvae_forward.1} parent=0 // pred_check_branch
    %38 = sbr.rel (0) target = $region41
  $region40: #{cvae_forward.1} parent=0 // pred_region
    _
  $region41: #{cvae_forward.1} parent=0 // pred_fallthru
    _
  // Predicated region
  $region42: #{cvae_forward.1} parent=0 // pred_check
    _
  $region43: #{cvae_forward.1} parent=0 // pred_check_branch
    %40 = sbr.rel (0) target = $region45
  $region44: #{cvae_forward.1} parent=0 // pred_region
    _
  $region45: #{cvae_forward.1} parent=0 // pred_fallthru
    _
  // Predicated region
  $region46: #{cvae_forward.1} parent=0 // pred_check
    _
  $region47: #{cvae_forward.1} parent=0 // pred_check_branch
    %42 = sbr.rel (0) target = $region49
  $region48: #{cvae_forward.1} parent=0 // pred_region
    _
  $region49: #{cvae_forward.1} parent=0 // pred_fallthru
    _
  %v44 = vld [vmem:[%s0] sm:$0xff]
  %v45 = vld [vmem:[%s0 + $0x8] sm:$0xff]
  %v46 = vld [vmem:[%s0 + $0x10] sm:$0xff]
  %v47 = vld [vmem:[%s0 + $0x18] sm:$0xf]
  %v48 = vld [vmem:[%s4] sm:$0xf]
  %v49 = vld [vmem:[%s4 + $0x4] sm:$0xf]
  %v50 = vld [vmem:[%s4 + $0x8] sm:$0xf]
  %v51 = vld [vmem:[%s4 + $0xc] sm:$0xf]
  %v52 = vld [vmem:[%s4 + $0x10] sm:$0xf]
  %v53 = vld [vmem:[%s4 + $0x14] sm:$0xf]
  %v54 = vld [vmem:[%s4 + $0x18] sm:$0xf]
  %v55 = vld [vmem:[%s4 + $0x1c] sm:$0xf]
  %v56 = vld [vmem:[%s4 + $0x20] sm:$0xf]
  %v57 = vld [vmem:[%s4 + $0x24] sm:$0xf]
  %v58 = vld [vmem:[%s4 + $0x28] sm:$0xf]
  %v59 = vld [vmem:[%s4 + $0x2c] sm:$0xf]
  %v60 = vld [vmem:[%s4 + $0x30] sm:$0xf]
  %v61 = vld [vmem:[%s4 + $0x34] sm:$0xf]
  %v62 = vld [vmem:[%s4 + $0x38] sm:$0xf]
  %v63 = vld [vmem:[%s4 + $0x3c] sm:$0xf]
  %v64 = vld [vmem:[%s4 + $0x40] sm:$0xf]
  %v65 = vld [vmem:[%s4 + $0x44] sm:$0xf]
  %v66 = vld [vmem:[%s4 + $0x48] sm:$0xf]
  %v67 = vld [vmem:[%s4 + $0x4c] sm:$0xf]
  %v68 = vld [vmem:[%s4 + $0x50] sm:$0xf]
  %v69 = vld [vmem:[%s4 + $0x54] sm:$0xf]
  %v70 = vld [vmem:[%s4 + $0x58] sm:$0xf]
  %v71 = vld [vmem:[%s4 + $0x5c] sm:$0xf]
  %v72 = vld [vmem:[%s4 + $0x60] sm:$0xf]
  %v73 = vld [vmem:[%s4 + $0x64] sm:$0xf]
  %v74 = vld [vmem:[%s4 + $0x68] sm:$0xf]
  %v75 = vld [vmem:[%s4 + $0x6c] sm:$0xf]
  %v76 = vld [vmem:[%s4 + $0x70] sm:$0xf]
  %v77 = vld [vmem:[%s4 + $0x74] sm:$0xf]
  %v78 = vld [vmem:[%s4 + $0x78] sm:$0xf]
  %v79 = vld [vmem:[%s4 + $0x7c] sm:$0xf]
  %v80 = vld [vmem:[%s4 + $0x80] sm:$0xf]
  %v81 = vld [vmem:[%s4 + $0x84] sm:$0xf]
  %v82 = vld [vmem:[%s4 + $0x88] sm:$0xf]
  %v83 = vld [vmem:[%s4 + $0x8c] sm:$0xf]
  %v84 = vld [vmem:[%s4 + $0x90] sm:$0xf]
  %v85 = vld [vmem:[%s4 + $0x94] sm:$0xf]
  %v86 = vld [vmem:[%s4 + $0x98] sm:$0xf]
  %v87 = vld [vmem:[%s4 + $0x9c] sm:$0xf]
  %v88 = vld [vmem:[%s4 + $0xa0] sm:$0xf]
  %v89 = vld [vmem:[%s4 + $0xa4] sm:$0xf]
  %v90 = vld [vmem:[%s4 + $0xa8] sm:$0xf]
  %v91 = vld [vmem:[%s4 + $0xac] sm:$0xf]
  %v92 = vld [vmem:[%s4 + $0xb0] sm:$0xf]
  %v93 = vld [vmem:[%s4 + $0xb4] sm:$0xf]
  %v94 = vld [vmem:[%s4 + $0xb8] sm:$0xf]
  %v95 = vld [vmem:[%s4 + $0xbc] sm:$0xf]
  %v96 = vld [vmem:[%s4 + $0xc0] sm:$0xf]
  %v97 = vld [vmem:[%s4 + $0xc4] sm:$0xf]
  %v98 = vld [vmem:[%s4 + $0xc8] sm:$0xf]
  %v99 = vld [vmem:[%s4 + $0xcc] sm:$0xf]
  %v100 = vld [vmem:[%s4 + $0xd0] sm:$0xf]
  %v101 = vld [vmem:[%s4 + $0xd4] sm:$0xf]
  %v102 = vld [vmem:[%s4 + $0xd8] sm:$0xf]
  %v103 = vld [vmem:[%s4 + $0xdc] sm:$0xf]
  %v104 = vld [vmem:[%s4 + $0xe0] sm:$0xf]
  %v105 = vld [vmem:[%s4 + $0xe4] sm:$0xf]
  %v106 = vld [vmem:[%s4 + $0xe8] sm:$0xf]
  %v107 = vld [vmem:[%s4 + $0xec] sm:$0xf]
  %v108 = vld [vmem:[%s4 + $0xf0] sm:$0xf]
  %v109 = vld [vmem:[%s4 + $0xf4] sm:$0xf]
  %v110 = vld [vmem:[%s4 + $0xf8] sm:$0xf]
  %v111 = vld [vmem:[%s4 + $0xfc] sm:$0xf]
  %v112 = vld [vmem:[%s4 + $0x100] sm:$0xf]
  %v113 = vld [vmem:[%s4 + $0x104] sm:$0xf]
  %v114 = vld [vmem:[%s4 + $0x108] sm:$0xf]
  %v115 = vld [vmem:[%s4 + $0x10c] sm:$0xf]
  %v116 = vld [vmem:[%s4 + $0x110] sm:$0xf]
  %v117 = vld [vmem:[%s4 + $0x114] sm:$0xf]
  %v118 = vld [vmem:[%s4 + $0x118] sm:$0xf]
  %v119 = vld [vmem:[%s4 + $0x11c] sm:$0xf]
  %v120 = vld [vmem:[%s4 + $0x120] sm:$0xf]
  %v121 = vld [vmem:[%s4 + $0x124] sm:$0xf]
  %v122 = vld [vmem:[%s4 + $0x128] sm:$0xf]
  %v123 = vld [vmem:[%s4 + $0x12c] sm:$0xf]
  %v124 = vld [vmem:[%s4 + $0x130] sm:$0xf]
  %v125 = vld [vmem:[%s4 + $0x134] sm:$0xf]
  %v126 = vld [vmem:[%s4 + $0x138] sm:$0xf]
  %v127 = vld [vmem:[%s4 + $0x13c] sm:$0xf]
  %v128 = vld [vmem:[%s4 + $0x140] sm:$0xf]
  %v129 = vld [vmem:[%s4 + $0x144] sm:$0xf]
  %v130 = vld [vmem:[%s4 + $0x148] sm:$0xf]
  %v131 = vld [vmem:[%s4 + $0x14c] sm:$0xf]
  %v132 = vld [vmem:[%s4 + $0x150] sm:$0xf]
  %v133 = vld [vmem:[%s4 + $0x154] sm:$0xf]
  %v134 = vld [vmem:[%s4 + $0x158] sm:$0xf]
  %v135 = vld [vmem:[%s4 + $0x15c] sm:$0xf]
  %v136 = vld [vmem:[%s4 + $0x160] sm:$0xf]
  %v137 = vld [vmem:[%s4 + $0x164] sm:$0xf]
  %v138 = vld [vmem:[%s4 + $0x168] sm:$0xf]
  %v139 = vld [vmem:[%s4 + $0x16c] sm:$0xf]
  %v140 = vld [vmem:[%s4 + $0x170] sm:$0xf]
  %v141 = vld [vmem:[%s4 + $0x174] sm:$0xf]
  %v142 = vld [vmem:[%s4 + $0x178] sm:$0xf]
  %v143 = vld [vmem:[%s4 + $0x17c] sm:$0xf]
  %v144 = vld [vmem:[%s4 + $0x180] sm:$0xf]
  %v145 = vld [vmem:[%s4 + $0x184] sm:$0xf]
  %v146 = vld [vmem:[%s2] sm:$0xff]
  %v151 = vunpack.c.l.b16 %v44
  %v152 = vunpack.c.h.b16 %v44
  %v153 = vunpack.c.l.b16 %v45
  %v154 = vunpack.c.h.b16 %v45
  %v155 = vunpack.c.l.b16 %v46
  %v156 = vunpack.c.h.b16 %v46
  %v157 = vunpack.c.l.b16 %v47
  %v158 = vpack.c.b16 %v151, %v151
  %v159 = vpack.c.b16 %v152, %v152
  %v160 = vpack.c.b16 %v153, %v153
  %v161 = vpack.c.b16 %v154, %v154
  %v162 = vpack.c.b16 %v155, %v155
  %v163 = vpack.c.b16 %v156, %v156
  %v164 = vpack.c.b16 %v157, %v157
  %v269 = vunpack.c.l.b16 %v48
  %v270 = vunpack.c.l.b16 %v49
  %v271 = vunpack.c.l.b16 %v50
  %v272 = vunpack.c.l.b16 %v51
  %v273 = vunpack.c.l.b16 %v52
  %v274 = vunpack.c.l.b16 %v53
  %v275 = vunpack.c.l.b16 %v54
  %v276 = vunpack.c.l.b16 %v55
  %v277 = vunpack.c.l.b16 %v56
  %v278 = vunpack.c.l.b16 %v57
  %v279 = vunpack.c.l.b16 %v58
  %v280 = vunpack.c.l.b16 %v59
  %v281 = vunpack.c.l.b16 %v60
  %v282 = vunpack.c.l.b16 %v61
  %v283 = vunpack.c.l.b16 %v62
  %v284 = vunpack.c.l.b16 %v63
  %v285 = vunpack.c.l.b16 %v64
  %v286 = vunpack.c.l.b16 %v65
  %v287 = vunpack.c.l.b16 %v66
  %v288 = vunpack.c.l.b16 %v67
  %v289 = vunpack.c.l.b16 %v68
  %v290 = vunpack.c.l.b16 %v69
  %v291 = vunpack.c.l.b16 %v70
  %v292 = vunpack.c.l.b16 %v71
  %v293 = vunpack.c.l.b16 %v72
  %v294 = vunpack.c.l.b16 %v73
  %v295 = vunpack.c.l.b16 %v74
  %v296 = vunpack.c.l.b16 %v75
  %v297 = vunpack.c.l.b16 %v76
  %v298 = vunpack.c.l.b16 %v77
  %v299 = vunpack.c.l.b16 %v78
  %v300 = vunpack.c.l.b16 %v79
  %v301 = vunpack.c.l.b16 %v80
  %v302 = vunpack.c.l.b16 %v81
  %v303 = vunpack.c.l.b16 %v82
  %v304 = vunpack.c.l.b16 %v83
  %v305 = vunpack.c.l.b16 %v84
  %v306 = vunpack.c.l.b16 %v85
  %v307 = vunpack.c.l.b16 %v86
  %v308 = vunpack.c.l.b16 %v87
  %v309 = vunpack.c.l.b16 %v88
  %v310 = vunpack.c.l.b16 %v89
  %v311 = vunpack.c.l.b16 %v90
  %v312 = vunpack.c.l.b16 %v91
  %v313 = vunpack.c.l.b16 %v92
  %v314 = vunpack.c.l.b16 %v93
  %v315 = vunpack.c.l.b16 %v94
  %v316 = vunpack.c.l.b16 %v95
  %v317 = vunpack.c.l.b16 %v96
  %v318 = vunpack.c.l.b16 %v97
  %v319 = vunpack.c.l.b16 %v98
  %v320 = vunpack.c.l.b16 %v99
  %v321 = vunpack.c.l.b16 %v100
  %v322 = vunpack.c.l.b16 %v101
  %v323 = vunpack.c.l.b16 %v102
  %v324 = vunpack.c.l.b16 %v103
  %v325 = vunpack.c.l.b16 %v104
  %v326 = vunpack.c.l.b16 %v105
  %v327 = vunpack.c.l.b16 %v106
  %v328 = vunpack.c.l.b16 %v107
  %v329 = vunpack.c.l.b16 %v108
  %v330 = vunpack.c.l.b16 %v109
  %v331 = vunpack.c.l.b16 %v110
  %v332 = vunpack.c.l.b16 %v111
  %v333 = vunpack.c.l.b16 %v112
  %v334 = vunpack.c.l.b16 %v113
  %v335 = vunpack.c.l.b16 %v114
  %v336 = vunpack.c.l.b16 %v115
  %v337 = vunpack.c.l.b16 %v116
  %v338 = vunpack.c.l.b16 %v117
  %v339 = vunpack.c.l.b16 %v118
  %v340 = vunpack.c.l.b16 %v119
  %v341 = vunpack.c.l.b16 %v120
  %v342 = vunpack.c.l.b16 %v121
  %v343 = vunpack.c.l.b16 %v122
  %v344 = vunpack.c.l.b16 %v123
  %v345 = vunpack.c.l.b16 %v124
  %v346 = vunpack.c.l.b16 %v125
  %v347 = vunpack.c.l.b16 %v126
  %v348 = vunpack.c.l.b16 %v127
  %v349 = vunpack.c.l.b16 %v128
  %v350 = vunpack.c.l.b16 %v129
  %v351 = vunpack.c.l.b16 %v130
  %v352 = vunpack.c.l.b16 %v131
  %v353 = vunpack.c.l.b16 %v132
  %v354 = vunpack.c.l.b16 %v133
  %v355 = vunpack.c.l.b16 %v134
  %v356 = vunpack.c.l.b16 %v135
  %v357 = vunpack.c.l.b16 %v136
  %v358 = vunpack.c.l.b16 %v137
  %v359 = vunpack.c.l.b16 %v138
  %v360 = vunpack.c.l.b16 %v139
  %v361 = vunpack.c.l.b16 %v140
  %v362 = vunpack.c.l.b16 %v141
  %v363 = vunpack.c.l.b16 %v142
  %v364 = vunpack.c.l.b16 %v143
  %v365 = vunpack.c.l.b16 %v144
  %v366 = vunpack.c.l.b16 %v145
  %v367 = vpack.c.b16 %v270, %v269
  %v368 = vpack.c.b16 %v272, %v271
  %v369 = vpack.c.b16 %v274, %v273
  %v370 = vpack.c.b16 %v276, %v275
  %v371 = vpack.c.b16 %v278, %v277
  %v372 = vpack.c.b16 %v280, %v279
  %v373 = vpack.c.b16 %v282, %v281
  %v374 = vpack.c.b16 %v284, %v283
  %v375 = vpack.c.b16 %v286, %v285
  %v376 = vpack.c.b16 %v288, %v287
  %v377 = vpack.c.b16 %v290, %v289
  %v378 = vpack.c.b16 %v292, %v291
  %v379 = vpack.c.b16 %v294, %v293
  %v380 = vpack.c.b16 %v296, %v295
  %v381 = vpack.c.b16 %v298, %v297
  %v382 = vpack.c.b16 %v300, %v299
  %v383 = vpack.c.b16 %v302, %v301
  %v384 = vpack.c.b16 %v304, %v303
  %v385 = vpack.c.b16 %v306, %v305
  %v386 = vpack.c.b16 %v308, %v307
  %v387 = vpack.c.b16 %v310, %v309
  %v388 = vpack.c.b16 %v312, %v311
  %v389 = vpack.c.b16 %v314, %v313
  %v390 = vpack.c.b16 %v316, %v315
  %v391 = vpack.c.b16 %v318, %v317
  %v392 = vpack.c.b16 %v320, %v319
  %v393 = vpack.c.b16 %v322, %v321
  %v394 = vpack.c.b16 %v324, %v323
  %v395 = vpack.c.b16 %v326, %v325
  %v396 = vpack.c.b16 %v328, %v327
  %v397 = vpack.c.b16 %v330, %v329
  %v398 = vpack.c.b16 %v332, %v331
  %v399 = vpack.c.b16 %v334, %v333
  %v400 = vpack.c.b16 %v336, %v335
  %v401 = vpack.c.b16 %v338, %v337
  %v402 = vpack.c.b16 %v340, %v339
  %v403 = vpack.c.b16 %v342, %v341
  %v404 = vpack.c.b16 %v344, %v343
  %v405 = vpack.c.b16 %v346, %v345
  %v406 = vpack.c.b16 %v348, %v347
  %v407 = vpack.c.b16 %v350, %v349
  %v408 = vpack.c.b16 %v352, %v351
  %v409 = vpack.c.b16 %v354, %v353
  %v410 = vpack.c.b16 %v356, %v355
  %v411 = vpack.c.b16 %v358, %v357
  %v412 = vpack.c.b16 %v360, %v359
  %v413 = vpack.c.b16 %v362, %v361
  %v414 = vpack.c.b16 %v364, %v363
  %v415 = vpack.c.b16 %v366, %v365
  %vm465 = vcmask 130048
  %v467 = vsel %vm465, %v164, 0
  %469 = vmatprep.subr.bf16.mxu0 0
  %470 = vmatpush1.bf16.msra.mxu0 %v367
  %471 = vmatprep.subr.bf16.mxu0 0
  %472 = vmatpush1.bf16.msra.mxu0 %v368
  %473 = vmatprep.subr.bf16.mxu0 0
  %474 = vmatpush1.bf16.msra.mxu0 %v369
  %475 = vmatprep.subr.bf16.mxu0 0
  %476 = vmatpush1.bf16.msra.mxu0 %v370
  %477 = vmatprep.subr.bf16.mxu0 0
  %478 = vmatpush1.bf16.msra.mxu0 %v371
  %479 = vmatprep.subr.bf16.mxu0 0
  %480 = vmatpush1.bf16.msra.mxu0 %v372
  %481 = vmatprep.subr.bf16.mxu0 0
  %482 = vmatpush1.bf16.msra.mxu0 %v373
  %483 = vmatprep.subr.bf16.mxu0 0
  %484 = vmatpush1.bf16.msra.mxu0 %v374
  %485 = vmatprep.subr.bf16.mxu0 0
  %486 = vmatpush1.bf16.msra.mxu0 %v375
  %487 = vmatprep.subr.bf16.mxu0 0
  %488 = vmatpush1.bf16.msra.mxu0 %v376
  %489 = vmatprep.subr.bf16.mxu0 0
  %490 = vmatpush1.bf16.msra.mxu0 %v377
  %491 = vmatprep.subr.bf16.mxu0 0
  %492 = vmatpush1.bf16.msra.mxu0 %v378
  %493 = vmatprep.subr.bf16.mxu0 0
  %494 = vmatpush1.bf16.msra.mxu0 %v379
  %495 = vmatprep.subr.bf16.mxu0 0
  %496 = vmatpush1.bf16.msra.mxu0 %v380
  %497 = vmatprep.subr.bf16.mxu0 0
  %498 = vmatpush1.bf16.msra.mxu0 %v381
  %499 = vmatprep.subr.bf16.mxu0 0
  %500 = vmatpush1.bf16.msra.mxu0 %v382
  %501 = vmatprep.mubr.bf16.mxu0 %v159
  %502 = vmatmul.mubr.bf16.gmra.mrb[0].mxu0 %v158
  %v503 = vpop.f32.mrb[0].mxu0
  %v504 = vadd.f32 %v146, %v503
  %v505 = vpop.f32.mrb[0].mxu0
  %v506 = vpop.f32.mrb[0].mxu0
  %v507 = vpop.f32.mrb[0].mxu0
  %508 = vdwg.mxu0
  %509 = vmatprep.subr.bf16.mxu0 0
  %510 = vmatpush1.bf16.msra.mxu0 %v383
  %511 = vmatprep.subr.bf16.mxu0 0
  %512 = vmatpush1.bf16.msra.mxu0 %v384
  %513 = vmatprep.subr.bf16.mxu0 0
  %514 = vmatpush1.bf16.msra.mxu0 %v385
  %515 = vmatprep.subr.bf16.mxu0 0
  %516 = vmatpush1.bf16.msra.mxu0 %v386
  %517 = vmatprep.subr.bf16.mxu0 0
  %518 = vmatpush1.bf16.msra.mxu0 %v387
  %519 = vmatprep.subr.bf16.mxu0 0
  %520 = vmatpush1.bf16.msra.mxu0 %v388
  %521 = vmatprep.subr.bf16.mxu0 0
  %522 = vmatpush1.bf16.msra.mxu0 %v389
  %523 = vmatprep.subr.bf16.mxu0 0
  %524 = vmatpush1.bf16.msra.mxu0 %v390
  %525 = vmatprep.subr.bf16.mxu0 0
  %526 = vmatpush1.bf16.msra.mxu0 %v391
  %527 = vmatprep.subr.bf16.mxu0 0
  %528 = vmatpush1.bf16.msra.mxu0 %v392
  %529 = vmatprep.subr.bf16.mxu0 0
  %530 = vmatpush1.bf16.msra.mxu0 %v393
  %531 = vmatprep.subr.bf16.mxu0 0
  %532 = vmatpush1.bf16.msra.mxu0 %v394
  %533 = vmatprep.subr.bf16.mxu0 0
  %534 = vmatpush1.bf16.msra.mxu0 %v395
  %535 = vmatprep.subr.bf16.mxu0 0
  %536 = vmatpush1.bf16.msra.mxu0 %v396
  %537 = vmatprep.subr.bf16.mxu0 0
  %538 = vmatpush1.bf16.msra.mxu0 %v397
  %539 = vmatprep.subr.bf16.mxu0 0
  %540 = vmatpush1.bf16.msra.mxu0 %v398
  %541 = vmatprep.mubr.bf16.mxu0 %v161
  %542 = vmatmul.mubr.bf16.gmra.mrb[0].mxu0 %v160
  %v543 = vpop.f32.mrb[0].mxu0
  %v544 = vadd.f32 %v504, %v543
  %v545 = vpop.f32.mrb[0].mxu0
  %v546 = vpop.f32.mrb[0].mxu0
  %v547 = vpop.f32.mrb[0].mxu0
  %548 = vdwg.mxu0
  %549 = vmatprep.subr.bf16.mxu0 0
  %550 = vmatpush1.bf16.msra.mxu0 %v399
  %551 = vmatprep.subr.bf16.mxu0 0
  %552 = vmatpush1.bf16.msra.mxu0 %v400
  %553 = vmatprep.subr.bf16.mxu0 0
  %554 = vmatpush1.bf16.msra.mxu0 %v401
  %555 = vmatprep.subr.bf16.mxu0 0
  %556 = vmatpush1.bf16.msra.mxu0 %v402
  %557 = vmatprep.subr.bf16.mxu0 0
  %558 = vmatpush1.bf16.msra.mxu0 %v403
  %559 = vmatprep.subr.bf16.mxu0 0
  %560 = vmatpush1.bf16.msra.mxu0 %v404
  %561 = vmatprep.subr.bf16.mxu0 0
  %562 = vmatpush1.bf16.msra.mxu0 %v405
  %563 = vmatprep.subr.bf16.mxu0 0
  %564 = vmatpush1.bf16.msra.mxu0 %v406
  %565 = vmatprep.subr.bf16.mxu0 0
  %566 = vmatpush1.bf16.msra.mxu0 %v407
  %567 = vmatprep.subr.bf16.mxu0 0
  %568 = vmatpush1.bf16.msra.mxu0 %v408
  %569 = vmatprep.subr.bf16.mxu0 0
  %570 = vmatpush1.bf16.msra.mxu0 %v409
  %571 = vmatprep.subr.bf16.mxu0 0
  %572 = vmatpush1.bf16.msra.mxu0 %v410
  %573 = vmatprep.subr.bf16.mxu0 0
  %574 = vmatpush1.bf16.msra.mxu0 %v411
  %575 = vmatprep.subr.bf16.mxu0 0
  %576 = vmatpush1.bf16.msra.mxu0 %v412
  %577 = vmatprep.subr.bf16.mxu0 0
  %578 = vmatpush1.bf16.msra.mxu0 %v413
  %579 = vmatprep.subr.bf16.mxu0 0
  %580 = vmatpush1.bf16.msra.mxu0 %v414
  %581 = vmatprep.mubr.bf16.mxu0 %v163
  %582 = vmatmul.mubr.bf16.gmra.mrb[0].mxu0 %v162
  %v583 = vpop.f32.mrb[0].mxu0
  %v584 = vadd.f32 %v544, %v583
  %v585 = vpop.f32.mrb[0].mxu0
  %v586 = vpop.f32.mrb[0].mxu0
  %v587 = vpop.f32.mrb[0].mxu0
  %588 = vdwg.mxu0
  %589 = vmatprep.subr.bf16.mxu0 0
  %590 = vmatpush1.bf16.msra.mxu0 %v415
  %591 = vmatprep.subr.bf16.mxu0 0
  %592 = vmatpush1.bf16.msra.mxu0 0
  %593 = vmatprep.subr.bf16.mxu0 0
  %594 = vmatpush1.bf16.msra.mxu0 0
  %595 = vmatprep.subr.bf16.mxu0 0
  %596 = vmatpush1.bf16.msra.mxu0 0
  %597 = vmatprep.subr.bf16.mxu0 0
  %598 = vmatpush1.bf16.msra.mxu0 0
  %599 = vmatprep.subr.bf16.mxu0 0
  %600 = vmatpush1.bf16.msra.mxu0 0
  %601 = vmatprep.subr.bf16.mxu0 0
  %602 = vmatpush1.bf16.msra.mxu0 0
  %603 = vmatprep.subr.bf16.mxu0 0
  %604 = vmatpush1.bf16.msra.mxu0 0
  %605 = vmatprep.subr.bf16.mxu0 0
  %606 = vmatpush1.bf16.msra.mxu0 0
  %607 = vmatprep.subr.bf16.mxu0 0
  %608 = vmatpush1.bf16.msra.mxu0 0
  %609 = vmatprep.subr.bf16.mxu0 0
  %610 = vmatpush1.bf16.msra.mxu0 0
  %611 = vmatprep.subr.bf16.mxu0 0
  %612 = vmatpush1.bf16.msra.mxu0 0
  %613 = vmatprep.subr.bf16.mxu0 0
  %614 = vmatpush1.bf16.msra.mxu0 0
  %615 = vmatprep.subr.bf16.mxu0 0
  %616 = vmatpush1.bf16.msra.mxu0 0
  %617 = vmatprep.subr.bf16.mxu0 0
  %618 = vmatpush1.bf16.msra.mxu0 0
  %619 = vmatprep.subr.bf16.mxu0 0
  %620 = vmatpush1.bf16.msra.mxu0 0
  %621 = vmatprep.mubr.bf16.mxu0 0
  %622 = vmatmul.mubr.bf16.gmra.mrb[0].mxu0 %v467
  %v623 = vpop.f32.mrb[0].mxu0
  %v624 = vadd.f32 %v584, %v623
  %v625 = vpop.f32.mrb[0].mxu0
  %v626 = vpop.f32.mrb[0].mxu0
  %v627 = vpop.f32.mrb[0].mxu0
  %628 = vdwg.mxu0
  %v629 = vld [vmem:[%s5] sm:$0x1]
  %v631 = vlaneseq
  %v632 = vshrl.u32 %v631, 7
  %v633 = vsub.s32 0, %v632
  %v634 = vrot.slane %v629, %v633
  %v636 = vadd.f32 %v624, %v634
  %v637 = vmax.f32 %v636, 0.0
  %v638 = vld [vmem:[%s6] sm:$0xff]
  %v639 = vld [vmem:[%s6 + $0x8] sm:$0xff]
  %v640 = vld [vmem:[%s6 + $0x10] sm:$0xff]
  %v641 = vld [vmem:[%s6 + $0x18] sm:$0xff]
  %v642 = vld [vmem:[%s6 + $0x20] sm:$0xff]
  %v643 = vld [vmem:[%s6 + $0x28] sm:$0xff]
  %v644 = vld [vmem:[%s6 + $0x30] sm:$0xff]
  %v645 = vld [vmem:[%s6 + $0x38] sm:$0xff]
  %v646 = vld [vmem:[%s6 + $0x40] sm:$0xff]
  %v647 = vld [vmem:[%s6 + $0x48] sm:$0xff]
  %v648 = vld [vmem:[%s6 + $0x50] sm:$0xff]
  %v649 = vld [vmem:[%s6 + $0x58] sm:$0xff]
  %v650 = vld [vmem:[%s6 + $0x60] sm:$0xff]
  %v651 = vld [vmem:[%s6 + $0x68] sm:$0xff]
  %v652 = vld [vmem:[%s6 + $0x70] sm:$0xff]
  %v653 = vld [vmem:[%s6 + $0x78] sm:$0xff]
  %v654 = vld [vmem:[%s7] sm:$0x1]
  %v656 = vlaneseq
  %v657 = vshrl.u32 %v656, 7
  %v658 = vsub.s32 0, %v657
  %v659 = vrot.slane %v654, %v658
  %661 = vmatprep.subr.mxu0 0.0
  %662 = vmatpush1.msra.mxu0 %v638
  %663 = vmatprep.subr.mxu0 0.0
  %664 = vmatpush1.msra.mxu0 %v639
  %665 = vmatprep.subr.mxu0 0.0
  %666 = vmatpush1.msra.mxu0 %v640
  %667 = vmatprep.subr.mxu0 0.0
  %668 = vmatpush1.msra.mxu0 %v641
  %669 = vmatprep.subr.mxu0 0.0
  %670 = vmatpush1.msra.mxu0 %v642
  %671 = vmatprep.subr.mxu0 0.0
  %672 = vmatpush1.msra.mxu0 %v643
  %673 = vmatprep.subr.mxu0 0.0
  %674 = vmatpush1.msra.mxu0 %v644
  %675 = vmatprep.subr.mxu0 0.0
  %676 = vmatpush1.msra.mxu0 %v645
  %677 = vmatprep.subr.mxu0 0.0
  %678 = vmatpush1.msra.mxu0 %v646
  %679 = vmatprep.subr.mxu0 0.0
  %680 = vmatpush1.msra.mxu0 %v647
  %681 = vmatprep.subr.mxu0 0.0
  %682 = vmatpush1.msra.mxu0 %v648
  %683 = vmatprep.subr.mxu0 0.0
  %684 = vmatpush1.msra.mxu0 %v649
  %685 = vmatprep.subr.mxu0 0.0
  %686 = vmatpush1.msra.mxu0 %v650
  %687 = vmatprep.subr.mxu0 0.0
  %688 = vmatpush1.msra.mxu0 %v651
  %689 = vmatprep.subr.mxu0 0.0
  %690 = vmatpush1.msra.mxu0 %v652
  %691 = vmatprep.subr.mxu0 0.0
  %692 = vmatpush1.msra.mxu0 %v653
  %693 = vmatprep.subr.mxu0 0.0
  %694 = vmatpush1.msra.mxu0 0.0
  %695 = vmatprep.subr.mxu0 0.0
  %696 = vmatpush1.msra.mxu0 0.0
  %697 = vmatprep.subr.mxu0 0.0
  %698 = vmatpush1.msra.mxu0 0.0
  %699 = vmatprep.subr.mxu0 0.0
  %700 = vmatpush1.msra.mxu0 0.0
  %701 = vmatprep.subr.mxu0 0.0
  %702 = vmatpush1.msra.mxu0 0.0
  %703 = vmatprep.subr.mxu0 0.0
  %704 = vmatpush1.msra.mxu0 0.0
  %705 = vmatprep.subr.mxu0 0.0
  %706 = vmatpush1.msra.mxu0 0.0
  %707 = vmatprep.subr.mxu0 0.0
  %708 = vmatpush1.msra.mxu0 0.0
  %709 = vmatprep.subr.mxu0 0.0
  %710 = vmatpush1.msra.mxu0 0.0
  %711 = vmatprep.subr.mxu0 0.0
  %712 = vmatpush1.msra.mxu0 0.0
  %713 = vmatprep.subr.mxu0 0.0
  %714 = vmatpush1.msra.mxu0 0.0
  %715 = vmatprep.subr.mxu0 0.0
  %716 = vmatpush1.msra.mxu0 0.0
  %717 = vmatprep.subr.mxu0 0.0
  %718 = vmatpush1.msra.mxu0 0.0
  %719 = vmatprep.subr.mxu0 0.0
  %720 = vmatpush1.msra.mxu0 0.0
  %721 = vmatprep.subr.mxu0 0.0
  %722 = vmatpush1.msra.mxu0 0.0
  %723 = vmatprep.subr.mxu0 0.0
  %724 = vmatpush1.msra.mxu0 0.0
  %725 = vmatprep.mubr.f32.mxu0 0.0
  %726 = vmatmul.mubr.f32.gmra.mrb[0].mxu0 %v637
  %v727 = vpop.f32.mrb[0].mxu0
  %v728 = vadd.f32 %v659, %v727
  %v729 = vpop.f32.mrb[0].mxu0
  %730 = vdwg.mxu0
  %v731 = vmul.f32 %v728, 1.442695
  %v732 = vpow.pop %v731
  %v733 = vld [vmem:[%s1] sm:$0xff]
  %735 = vrot.lane.b32.xlu0 %v733, 4
  %v736 = vpop.permute.xlu0 %735
  %v738 = vmul.f32 %v732, %v736
  %740 = vrot.lane.b32.xlu0 %v738, 124
  %v741 = vpop.permute.xlu0 %740
  %v743 = vadd.f32 %v728, %v741
  %v744 = vld [vmem:[%s8] sm:$0xf]
  %v745 = vld [vmem:[%s3] sm:$0xff]
  %vm746 = vcmask 31744
  %v748 = vsel %vm746, %v743, 0
  %vm750 = vcmask 1043456
  %v752 = vsel %vm750, %v744, 0
  %754 = vmatprep.subr.mxu0 0.0
  %755 = vmatpush1.msra.mxu0 %v752
  %756 = vmatprep.subr.mxu0 0.0
  %757 = vmatpush1.msra.mxu0 0.0
  %758 = vmatprep.subr.mxu0 0.0
  %759 = vmatpush1.msra.mxu0 0.0
  %760 = vmatprep.subr.mxu0 0.0
  %761 = vmatpush1.msra.mxu0 0.0
  %762 = vmatprep.subr.mxu0 0.0
  %763 = vmatpush1.msra.mxu0 0.0
  %764 = vmatprep.subr.mxu0 0.0
  %765 = vmatpush1.msra.mxu0 0.0
  %766 = vmatprep.subr.mxu0 0.0
  %767 = vmatpush1.msra.mxu0 0.0
  %768 = vmatprep.subr.mxu0 0.0
  %769 = vmatpush1.msra.mxu0 0.0
  %770 = vmatprep.subr.mxu0 0.0
  %771 = vmatpush1.msra.mxu0 0.0
  %772 = vmatprep.subr.mxu0 0.0
  %773 = vmatpush1.msra.mxu0 0.0
  %774 = vmatprep.subr.mxu0 0.0
  %775 = vmatpush1.msra.mxu0 0.0
  %776 = vmatprep.subr.mxu0 0.0
  %777 = vmatpush1.msra.mxu0 0.0
  %778 = vmatprep.subr.mxu0 0.0
  %779 = vmatpush1.msra.mxu0 0.0
  %780 = vmatprep.subr.mxu0 0.0
  %781 = vmatpush1.msra.mxu0 0.0
  %782 = vmatprep.subr.mxu0 0.0
  %783 = vmatpush1.msra.mxu0 0.0
  %784 = vmatprep.subr.mxu0 0.0
  %785 = vmatpush1.msra.mxu0 0.0
  %786 = vmatprep.subr.mxu0 0.0
  %787 = vmatpush1.msra.mxu0 0.0
  %788 = vmatprep.subr.mxu0 0.0
  %789 = vmatpush1.msra.mxu0 0.0
  %790 = vmatprep.subr.mxu0 0.0
  %791 = vmatpush1.msra.mxu0 0.0
  %792 = vmatprep.subr.mxu0 0.0
  %793 = vmatpush1.msra.mxu0 0.0
  %794 = vmatprep.subr.mxu0 0.0
  %795 = vmatpush1.msra.mxu0 0.0
  %796 = vmatprep.subr.mxu0 0.0
  %797 = vmatpush1.msra.mxu0 0.0
  %798 = vmatprep.subr.mxu0 0.0
  %799 = vmatpush1.msra.mxu0 0.0
  %800 = vmatprep.subr.mxu0 0.0
  %801 = vmatpush1.msra.mxu0 0.0
  %802 = vmatprep.subr.mxu0 0.0
  %803 = vmatpush1.msra.mxu0 0.0
  %804 = vmatprep.subr.mxu0 0.0
  %805 = vmatpush1.msra.mxu0 0.0
  %806 = vmatprep.subr.mxu0 0.0
  %807 = vmatpush1.msra.mxu0 0.0
  %808 = vmatprep.subr.mxu0 0.0
  %809 = vmatpush1.msra.mxu0 0.0
  %810 = vmatprep.subr.mxu0 0.0
  %811 = vmatpush1.msra.mxu0 0.0
  %812 = vmatprep.subr.mxu0 0.0
  %813 = vmatpush1.msra.mxu0 0.0
  %814 = vmatprep.subr.mxu0 0.0
  %815 = vmatpush1.msra.mxu0 0.0
  %816 = vmatprep.subr.mxu0 0.0
  %817 = vmatpush1.msra.mxu0 0.0
  %818 = vmatprep.mubr.f32.mxu0 0.0
  %819 = vmatmul.mubr.f32.gmra.mrb[0].mxu0 %v748
  %v820 = vpop.f32.mrb[0].mxu0
  %v821 = vadd.f32 %v745, %v820
  %v822 = vpop.f32.mrb[0].mxu0
  %823 = vdwg.mxu0
  %v824 = vld [vmem:[%s9] sm:$0x1]
  %v826 = vlaneseq
  %v827 = vshrl.u32 %v826, 7
  %v828 = vsub.s32 0, %v827
  %v829 = vrot.slane %v824, %v828
  %v831 = vadd.f32 %v821, %v829
  %v832 = vmax.f32 %v831, 0.0
  %v833 = vpack.c.bf16 %v832, %v832
  %v834 = vld [vmem:[%s10] sm:$0xff]
  %v835 = vld [vmem:[%s10 + $0x8] sm:$0xff]
  %v836 = vld [vmem:[%s10 + $0x10] sm:$0xff]
  %v837 = vld [vmem:[%s10 + $0x18] sm:$0xf]
  %v838 = vld [vmem:[%s10 + $0x1c] sm:$0xff]
  %v839 = vld [vmem:[%s10 + $0x24] sm:$0xff]
  %v840 = vld [vmem:[%s10 + $0x2c] sm:$0xff]
  %v841 = vld [vmem:[%s10 + $0x34] sm:$0xf]
  %v842 = vld [vmem:[%s10 + $0x38] sm:$0xff]
  %v843 = vld [vmem:[%s10 + $0x40] sm:$0xff]
  %v844 = vld [vmem:[%s10 + $0x48] sm:$0xff]
  %v845 = vld [vmem:[%s10 + $0x50] sm:$0xf]
  %v846 = vld [vmem:[%s10 + $0x54] sm:$0xff]
  %v847 = vld [vmem:[%s10 + $0x5c] sm:$0xff]
  %v848 = vld [vmem:[%s10 + $0x64] sm:$0xff]
  %v849 = vld [vmem:[%s10 + $0x6c] sm:$0xf]
  %v850 = vld [vmem:[%s10 + $0x70] sm:$0xff]
  %v851 = vld [vmem:[%s10 + $0x78] sm:$0xff]
  %v852 = vld [vmem:[%s10 + $0x80] sm:$0xff]
  %v853 = vld [vmem:[%s10 + $0x88] sm:$0xf]
  %v854 = vld [vmem:[%s10 + $0x8c] sm:$0xff]
  %v855 = vld [vmem:[%s10 + $0x94] sm:$0xff]
  %v856 = vld [vmem:[%s10 + $0x9c] sm:$0xff]
  %v857 = vld [vmem:[%s10 + $0xa4] sm:$0xf]
  %v858 = vld [vmem:[%s10 + $0xa8] sm:$0xff]
  %v859 = vld [vmem:[%s10 + $0xb0] sm:$0xff]
  %v860 = vld [vmem:[%s10 + $0xb8] sm:$0xff]
  %v861 = vld [vmem:[%s10 + $0xc0] sm:$0xf]
  %v862 = vld [vmem:[%s10 + $0xc4] sm:$0xff]
  %v863 = vld [vmem:[%s10 + $0xcc] sm:$0xff]
  %v864 = vld [vmem:[%s10 + $0xd4] sm:$0xff]
  %v865 = vld [vmem:[%s10 + $0xdc] sm:$0xf]
  %v866 = vld [vmem:[%s10 + $0xe0] sm:$0xff]
  %v867 = vld [vmem:[%s10 + $0xe8] sm:$0xff]
  %v868 = vld [vmem:[%s10 + $0xf0] sm:$0xff]
  %v869 = vld [vmem:[%s10 + $0xf8] sm:$0xf]
  %v870 = vld [vmem:[%s10 + $0xfc] sm:$0xff]
  %v871 = vld [vmem:[%s10 + $0x104] sm:$0xff]
  %v872 = vld [vmem:[%s10 + $0x10c] sm:$0xff]
  %v873 = vld [vmem:[%s10 + $0x114] sm:$0xf]
  %v874 = vld [vmem:[%s10 + $0x118] sm:$0xff]
  %v875 = vld [vmem:[%s10 + $0x120] sm:$0xff]
  %v876 = vld [vmem:[%s10 + $0x128] sm:$0xff]
  %v877 = vld [vmem:[%s10 + $0x130] sm:$0xf]
  %v878 = vld [vmem:[%s10 + $0x134] sm:$0xff]
  %v879 = vld [vmem:[%s10 + $0x13c] sm:$0xff]
  %v880 = vld [vmem:[%s10 + $0x144] sm:$0xff]
  %v881 = vld [vmem:[%s10 + $0x14c] sm:$0xf]
  %v882 = vld [vmem:[%s10 + $0x150] sm:$0xff]
  %v883 = vld [vmem:[%s10 + $0x158] sm:$0xff]
  %v884 = vld [vmem:[%s10 + $0x160] sm:$0xff]
  %v885 = vld [vmem:[%s10 + $0x168] sm:$0xf]
  %v886 = vld [vmem:[%s10 + $0x16c] sm:$0xff]
  %v887 = vld [vmem:[%s10 + $0x174] sm:$0xff]
  %v888 = vld [vmem:[%s10 + $0x17c] sm:$0xff]
  %v889 = vld [vmem:[%s10 + $0x184] sm:$0xf]
  %v890 = vld [vmem:[%s10 + $0x188] sm:$0xff]
  %v891 = vld [vmem:[%s10 + $0x190] sm:$0xff]
  %v892 = vld [vmem:[%s10 + $0x198] sm:$0xff]
  %v893 = vld [vmem:[%s10 + $0x1a0] sm:$0xf]
  %v894 = vld [vmem:[%s10 + $0x1a4] sm:$0xff]
  %v895 = vld [vmem:[%s10 + $0x1ac] sm:$0xff]
  %v896 = vld [vmem:[%s10 + $0x1b4] sm:$0xff]
  %v897 = vld [vmem:[%s10 + $0x1bc] sm:$0xf]
  %v898 = vld [vmem:[%s11] sm:$0x7f]
  %v900 = vlaneseq
  %v901 = vshrl.u32 %v900, 7
  %v902 = vsub.s32 0, %v901
  %v903 = vrot.slane %v898, %v902
  %v904 = vlaneseq
  %v905 = vshrl.u32 %v904, 7
  %v906 = vsub.s32 1, %v905
  %v907 = vrot.slane %v898, %v906
  %v908 = vlaneseq
  %v909 = vshrl.u32 %v908, 7
  %v910 = vsub.s32 2, %v909
  %v911 = vrot.slane %v898, %v910
  %v912 = vlaneseq
  %v913 = vshrl.u32 %v912, 7
  %v914 = vsub.s32 3, %v913
  %v915 = vrot.slane %v898, %v914
  %v916 = vlaneseq
  %v917 = vshrl.u32 %v916, 7
  %v918 = vsub.s32 4, %v917
  %v919 = vrot.slane %v898, %v918
  %v920 = vlaneseq
  %v921 = vshrl.u32 %v920, 7
  %v922 = vsub.s32 5, %v921
  %v923 = vrot.slane %v898, %v922
  %v924 = vlaneseq
  %v925 = vshrl.u32 %v924, 7
  %v926 = vsub.s32 6, %v925
  %v927 = vrot.slane %v898, %v926
  %v999 = vunpack.c.l.b16 %v834
  %v1000 = vunpack.c.h.b16 %v834
  %v1001 = vunpack.c.l.b16 %v835
  %v1002 = vunpack.c.h.b16 %v835
  %v1003 = vunpack.c.l.b16 %v836
  %v1004 = vunpack.c.h.b16 %v836
  %v1005 = vunpack.c.l.b16 %v837
  %v1006 = vunpack.c.l.b16 %v838
  %v1007 = vunpack.c.h.b16 %v838
  %v1008 = vunpack.c.l.b16 %v839
  %v1009 = vunpack.c.h.b16 %v839
  %v1010 = vunpack.c.l.b16 %v840
  %v1011 = vunpack.c.h.b16 %v840
  %v1012 = vunpack.c.l.b16 %v841
  %v1013 = vunpack.c.l.b16 %v842
  %v1014 = vunpack.c.h.b16 %v842
  %v1015 = vunpack.c.l.b16 %v843
  %v1016 = vunpack.c.h.b16 %v843
  %v1017 = vunpack.c.l.b16 %v844
  %v1018 = vunpack.c.h.b16 %v844
  %v1019 = vunpack.c.l.b16 %v845
  %v1020 = vunpack.c.l.b16 %v846
  %v1021 = vunpack.c.h.b16 %v846
  %v1022 = vunpack.c.l.b16 %v847
  %v1023 = vunpack.c.h.b16 %v847
  %v1024 = vunpack.c.l.b16 %v848
  %v1025 = vunpack.c.h.b16 %v848
  %v1026 = vunpack.c.l.b16 %v849
  %v1027 = vunpack.c.l.b16 %v850
  %v1028 = vunpack.c.h.b16 %v850
  %v1029 = vunpack.c.l.b16 %v851
  %v1030 = vunpack.c.h.b16 %v851
  %v1031 = vunpack.c.l.b16 %v852
  %v1032 = vunpack.c.h.b16 %v852
  %v1033 = vunpack.c.l.b16 %v853
  %v1034 = vunpack.c.l.b16 %v854
  %v1035 = vunpack.c.h.b16 %v854
  %v1036 = vunpack.c.l.b16 %v855
  %v1037 = vunpack.c.h.b16 %v855
  %v1038 = vunpack.c.l.b16 %v856
  %v1039 = vunpack.c.h.b16 %v856
  %v1040 = vunpack.c.l.b16 %v857
  %v1041 = vunpack.c.l.b16 %v858
  %v1042 = vunpack.c.h.b16 %v858
  %v1043 = vunpack.c.l.b16 %v859
  %v1044 = vunpack.c.h.b16 %v859
  %v1045 = vunpack.c.l.b16 %v860
  %v1046 = vunpack.c.h.b16 %v860
  %v1047 = vunpack.c.l.b16 %v861
  %v1048 = vunpack.c.l.b16 %v862
  %v1049 = vunpack.c.h.b16 %v862
  %v1050 = vunpack.c.l.b16 %v863
  %v1051 = vunpack.c.h.b16 %v863
  %v1052 = vunpack.c.l.b16 %v864
  %v1053 = vunpack.c.h.b16 %v864
  %v1054 = vunpack.c.l.b16 %v865
  %v1055 = vunpack.c.l.b16 %v866
  %v1056 = vunpack.c.h.b16 %v866
  %v1057 = vunpack.c.l.b16 %v867
  %v1058 = vunpack.c.h.b16 %v867
  %v1059 = vunpack.c.l.b16 %v868
  %v1060 = vunpack.c.h.b16 %v868
  %v1061 = vunpack.c.l.b16 %v869
  %v1062 = vunpack.c.l.b16 %v870
  %v1063 = vunpack.c.h.b16 %v870
  %v1064 = vunpack.c.l.b16 %v871
  %v1065 = vunpack.c.h.b16 %v871
  %v1066 = vunpack.c.l.b16 %v872
  %v1067 = vunpack.c.h.b16 %v872
  %v1068 = vunpack.c.l.b16 %v873
  %v1069 = vunpack.c.l.b16 %v874
  %v1070 = vunpack.c.h.b16 %v874
  %v1071 = vunpack.c.l.b16 %v875
  %v1072 = vunpack.c.h.b16 %v875
  %v1073 = vunpack.c.l.b16 %v876
  %v1074 = vunpack.c.h.b16 %v876
  %v1075 = vunpack.c.l.b16 %v877
  %v1076 = vunpack.c.l.b16 %v878
  %v1077 = vunpack.c.h.b16 %v878
  %v1078 = vunpack.c.l.b16 %v879
  %v1079 = vunpack.c.h.b16 %v879
  %v1080 = vunpack.c.l.b16 %v880
  %v1081 = vunpack.c.h.b16 %v880
  %v1082 = vunpack.c.l.b16 %v881
  %v1083 = vunpack.c.l.b16 %v882
  %v1084 = vunpack.c.h.b16 %v882
  %v1085 = vunpack.c.l.b16 %v883
  %v1086 = vunpack.c.h.b16 %v883
  %v1087 = vunpack.c.l.b16 %v884
  %v1088 = vunpack.c.h.b16 %v884
  %v1089 = vunpack.c.l.b16 %v885
  %v1090 = vunpack.c.l.b16 %v886
  %v1091 = vunpack.c.h.b16 %v886
  %v1092 = vunpack.c.l.b16 %v887
  %v1093 = vunpack.c.h.b16 %v887
  %v1094 = vunpack.c.l.b16 %v888
  %v1095 = vunpack.c.h.b16 %v888
  %v1096 = vunpack.c.l.b16 %v889
  %v1097 = vunpack.c.l.b16 %v890
  %v1098 = vunpack.c.h.b16 %v890
  %v1099 = vunpack.c.l.b16 %v891
  %v1100 = vunpack.c.h.b16 %v891
  %v1101 = vunpack.c.l.b16 %v892
  %v1102 = vunpack.c.h.b16 %v892
  %v1103 = vunpack.c.l.b16 %v893
  %v1104 = vunpack.c.l.b16 %v894
  %v1105 = vunpack.c.h.b16 %v894
  %v1106 = vunpack.c.l.b16 %v895
  %v1107 = vunpack.c.h.b16 %v895
  %v1108 = vunpack.c.l.b16 %v896
  %v1109 = vunpack.c.h.b16 %v896
  %v1110 = vunpack.c.l.b16 %v897
  %v1111 = vpack.c.b16 %v1006, %v999
  %v1112 = vpack.c.b16 %v1007, %v1000
  %v1113 = vpack.c.b16 %v1008, %v1001
  %v1114 = vpack.c.b16 %v1009, %v1002
  %v1115 = vpack.c.b16 %v1010, %v1003
  %v1116 = vpack.c.b16 %v1011, %v1004
  %v1117 = vpack.c.b16 %v1012, %v1005
  %v1118 = vpack.c.b16 %v1020, %v1013
  %v1119 = vpack.c.b16 %v1021, %v1014
  %v1120 = vpack.c.b16 %v1022, %v1015
  %v1121 = vpack.c.b16 %v1023, %v1016
  %v1122 = vpack.c.b16 %v1024, %v1017
  %v1123 = vpack.c.b16 %v1025, %v1018
  %v1124 = vpack.c.b16 %v1026, %v1019
  %v1125 = vpack.c.b16 %v1034, %v1027
  %v1126 = vpack.c.b16 %v1035, %v1028
  %v1127 = vpack.c.b16 %v1036, %v1029
  %v1128 = vpack.c.b16 %v1037, %v1030
  %v1129 = vpack.c.b16 %v1038, %v1031
  %v1130 = vpack.c.b16 %v1039, %v1032
  %v1131 = vpack.c.b16 %v1040, %v1033
  %v1132 = vpack.c.b16 %v1048, %v1041
  %v1133 = vpack.c.b16 %v1049, %v1042
  %v1134 = vpack.c.b16 %v1050, %v1043
  %v1135 = vpack.c.b16 %v1051, %v1044
  %v1136 = vpack.c.b16 %v1052, %v1045
  %v1137 = vpack.c.b16 %v1053, %v1046
  %v1138 = vpack.c.b16 %v1054, %v1047
  %v1139 = vpack.c.b16 %v1062, %v1055
  %v1140 = vpack.c.b16 %v1063, %v1056
  %v1141 = vpack.c.b16 %v1064, %v1057
  %v1142 = vpack.c.b16 %v1065, %v1058
  %v1143 = vpack.c.b16 %v1066, %v1059
  %v1144 = vpack.c.b16 %v1067, %v1060
  %v1145 = vpack.c.b16 %v1068, %v1061
  %v1146 = vpack.c.b16 %v1076, %v1069
  %v1147 = vpack.c.b16 %v1077, %v1070
  %v1148 = vpack.c.b16 %v1078, %v1071
  %v1149 = vpack.c.b16 %v1079, %v1072
  %v1150 = vpack.c.b16 %v1080, %v1073
  %v1151 = vpack.c.b16 %v1081, %v1074
  %v1152 = vpack.c.b16 %v1082, %v1075
  %v1153 = vpack.c.b16 %v1090, %v1083
  %v1154 = vpack.c.b16 %v1091, %v1084
  %v1155 = vpack.c.b16 %v1092, %v1085
  %v1156 = vpack.c.b16 %v1093, %v1086
  %v1157 = vpack.c.b16 %v1094, %v1087
  %v1158 = vpack.c.b16 %v1095, %v1088
  %v1159 = vpack.c.b16 %v1096, %v1089
  %v1160 = vpack.c.b16 %v1104, %v1097
  %v1161 = vpack.c.b16 %v1105, %v1098
  %v1162 = vpack.c.b16 %v1106, %v1099
  %v1163 = vpack.c.b16 %v1107, %v1100
  %v1164 = vpack.c.b16 %v1108, %v1101
  %v1165 = vpack.c.b16 %v1109, %v1102
  %v1166 = vpack.c.b16 %v1110, %v1103
  %1223 = vmatprep.subr.bf16.mxu0 %v1112
  %1224 = vmatpush1.bf16.msra.mxu0 %v1111
  %1225 = vmatprep.subr.bf16.mxu0 %v1119
  %1226 = vmatpush1.bf16.msra.mxu0 %v1118
  %1227 = vmatprep.subr.bf16.mxu0 %v1126
  %1228 = vmatpush1.bf16.msra.mxu0 %v1125
  %1229 = vmatprep.subr.bf16.mxu0 %v1133
  %1230 = vmatpush1.bf16.msra.mxu0 %v1132
  %1231 = vmatprep.subr.bf16.mxu0 %v1140
  %1232 = vmatpush1.bf16.msra.mxu0 %v1139
  %1233 = vmatprep.subr.bf16.mxu0 %v1147
  %1234 = vmatpush1.bf16.msra.mxu0 %v1146
  %1235 = vmatprep.subr.bf16.mxu0 %v1154
  %1236 = vmatpush1.bf16.msra.mxu0 %v1153
  %1237 = vmatprep.subr.bf16.mxu0 %v1161
  %1238 = vmatpush1.bf16.msra.mxu0 %v1160
  %1239 = vmatprep.subr.bf16.mxu0 0
  %1240 = vmatpush1.bf16.msra.mxu0 0
  %1241 = vmatprep.subr.bf16.mxu0 0
  %1242 = vmatpush1.bf16.msra.mxu0 0
  %1243 = vmatprep.subr.bf16.mxu0 0
  %1244 = vmatpush1.bf16.msra.mxu0 0
  %1245 = vmatprep.subr.bf16.mxu0 0
  %1246 = vmatpush1.bf16.msra.mxu0 0
  %1247 = vmatprep.subr.bf16.mxu0 0
  %1248 = vmatpush1.bf16.msra.mxu0 0
  %1249 = vmatprep.subr.bf16.mxu0 0
  %1250 = vmatpush1.bf16.msra.mxu0 0
  %1251 = vmatprep.subr.bf16.mxu0 0
  %1252 = vmatpush1.bf16.msra.mxu0 0
  %1253 = vmatprep.subr.bf16.mxu0 0
  %1254 = vmatpush1.bf16.msra.mxu0 0
  %1255 = vmatprep.mubr.bf16.mxu0 0
  %1256 = vmatmul.mubr.bf16.gmra.mrb[0].mxu0 %v833
  %v1257 = vpop.f32.mrb[0].mxu0
  %v1258 = vadd.f32 %v903, %v1257
  %v1259 = vpop.f32.mrb[0].mxu0
  %v1260 = vadd.f32 %v907, %v1259
  %v1261 = vpop.f32.mrb[0].mxu0
  %v1262 = vpop.f32.mrb[0].mxu0
  %1263 = vdwg.mxu0
  %1264 = vmatprep.subr.bf16.mxu0 %v1114
  %1265 = vmatpush1.bf16.msra.mxu0 %v1113
  %1266 = vmatprep.subr.bf16.mxu0 %v1121
  %1267 = vmatpush1.bf16.msra.mxu0 %v1120
  %1268 = vmatprep.subr.bf16.mxu0 %v1128
  %1269 = vmatpush1.bf16.msra.mxu0 %v1127
  %1270 = vmatprep.subr.bf16.mxu0 %v1135
  %1271 = vmatpush1.bf16.msra.mxu0 %v1134
  %1272 = vmatprep.subr.bf16.mxu0 %v1142
  %1273 = vmatpush1.bf16.msra.mxu0 %v1141
  %1274 = vmatprep.subr.bf16.mxu0 %v1149
  %1275 = vmatpush1.bf16.msra.mxu0 %v1148
  %1276 = vmatprep.subr.bf16.mxu0 %v1156
  %1277 = vmatpush1.bf16.msra.mxu0 %v1155
  %1278 = vmatprep.subr.bf16.mxu0 %v1163
  %1279 = vmatpush1.bf16.msra.mxu0 %v1162
  %1280 = vmatprep.subr.bf16.mxu0 0
  %1281 = vmatpush1.bf16.msra.mxu0 0
  %1282 = vmatprep.subr.bf16.mxu0 0
  %1283 = vmatpush1.bf16.msra.mxu0 0
  %1284 = vmatprep.subr.bf16.mxu0 0
  %1285 = vmatpush1.bf16.msra.mxu0 0
  %1286 = vmatprep.subr.bf16.mxu0 0
  %1287 = vmatpush1.bf16.msra.mxu0 0
  %1288 = vmatprep.subr.bf16.mxu0 0
  %1289 = vmatpush1.bf16.msra.mxu0 0
  %1290 = vmatprep.subr.bf16.mxu0 0
  %1291 = vmatpush1.bf16.msra.mxu0 0
  %1292 = vmatprep.subr.bf16.mxu0 0
  %1293 = vmatpush1.bf16.msra.mxu0 0
  %1294 = vmatprep.subr.bf16.mxu0 0
  %1295 = vmatpush1.bf16.msra.mxu0 0
  %1296 = vmatprep.mubr.bf16.mxu0 0
  %1297 = vmatmul.mubr.bf16.gmra.mrb[0].mxu0 %v833
  %v1298 = vpop.f32.mrb[0].mxu0
  %v1299 = vadd.f32 %v911, %v1298
  %v1300 = vpop.f32.mrb[0].mxu0
  %v1301 = vadd.f32 %v915, %v1300
  %v1302 = vpop.f32.mrb[0].mxu0
  %v1303 = vpop.f32.mrb[0].mxu0
  %1304 = vdwg.mxu0
  %1305 = vmatprep.subr.bf16.mxu0 %v1116
  %1306 = vmatpush1.bf16.msra.mxu0 %v1115
  %1307 = vmatprep.subr.bf16.mxu0 %v1123
  %1308 = vmatpush1.bf16.msra.mxu0 %v1122
  %1309 = vmatprep.subr.bf16.mxu0 %v1130
  %1310 = vmatpush1.bf16.msra.mxu0 %v1129
  %1311 = vmatprep.subr.bf16.mxu0 %v1137
  %1312 = vmatpush1.bf16.msra.mxu0 %v1136
  %1313 = vmatprep.subr.bf16.mxu0 %v1144
  %1314 = vmatpush1.bf16.msra.mxu0 %v1143
  %1315 = vmatprep.subr.bf16.mxu0 %v1151
  %1316 = vmatpush1.bf16.msra.mxu0 %v1150
  %1317 = vmatprep.subr.bf16.mxu0 %v1158
  %1318 = vmatpush1.bf16.msra.mxu0 %v1157
  %1319 = vmatprep.subr.bf16.mxu0 %v1165
  %1320 = vmatpush1.bf16.msra.mxu0 %v1164
  %1321 = vmatprep.subr.bf16.mxu0 0
  %1322 = vmatpush1.bf16.msra.mxu0 0
  %1323 = vmatprep.subr.bf16.mxu0 0
  %1324 = vmatpush1.bf16.msra.mxu0 0
  %1325 = vmatprep.subr.bf16.mxu0 0
  %1326 = vmatpush1.bf16.msra.mxu0 0
  %1327 = vmatprep.subr.bf16.mxu0 0
  %1328 = vmatpush1.bf16.msra.mxu0 0
  %1329 = vmatprep.subr.bf16.mxu0 0
  %1330 = vmatpush1.bf16.msra.mxu0 0
  %1331 = vmatprep.subr.bf16.mxu0 0
  %1332 = vmatpush1.bf16.msra.mxu0 0
  %1333 = vmatprep.subr.bf16.mxu0 0
  %1334 = vmatpush1.bf16.msra.mxu0 0
  %1335 = vmatprep.subr.bf16.mxu0 0
  %1336 = vmatpush1.bf16.msra.mxu0 0
  %1337 = vmatprep.mubr.bf16.mxu0 0
  %1338 = vmatmul.mubr.bf16.gmra.mrb[0].mxu0 %v833
  %v1339 = vpop.f32.mrb[0].mxu0
  %v1340 = vadd.f32 %v919, %v1339
  %v1341 = vpop.f32.mrb[0].mxu0
  %v1342 = vadd.f32 %v923, %v1341
  %v1343 = vpop.f32.mrb[0].mxu0
  %v1344 = vpop.f32.mrb[0].mxu0
  %1345 = vdwg.mxu0
  %1346 = vmatprep.subr.bf16.mxu0 0
  %1347 = vmatpush1.bf16.msra.mxu0 %v1117
  %1348 = vmatprep.subr.bf16.mxu0 0
  %1349 = vmatpush1.bf16.msra.mxu0 %v1124
  %1350 = vmatprep.subr.bf16.mxu0 0
  %1351 = vmatpush1.bf16.msra.mxu0 %v1131
  %1352 = vmatprep.subr.bf16.mxu0 0
  %1353 = vmatpush1.bf16.msra.mxu0 %v1138
  %1354 = vmatprep.subr.bf16.mxu0 0
  %1355 = vmatpush1.bf16.msra.mxu0 %v1145
  %1356 = vmatprep.subr.bf16.mxu0 0
  %1357 = vmatpush1.bf16.msra.mxu0 %v1152
  %1358 = vmatprep.subr.bf16.mxu0 0
  %1359 = vmatpush1.bf16.msra.mxu0 %v1159
  %1360 = vmatprep.subr.bf16.mxu0 0
  %1361 = vmatpush1.bf16.msra.mxu0 %v1166
  %1362 = vmatprep.subr.bf16.mxu0 0
  %1363 = vmatpush1.bf16.msra.mxu0 0
  %1364 = vmatprep.subr.bf16.mxu0 0
  %1365 = vmatpush1.bf16.msra.mxu0 0
  %1366 = vmatprep.subr.bf16.mxu0 0
  %1367 = vmatpush1.bf16.msra.mxu0 0
  %1368 = vmatprep.subr.bf16.mxu0 0
  %1369 = vmatpush1.bf16.msra.mxu0 0
  %1370 = vmatprep.subr.bf16.mxu0 0
  %1371 = vmatpush1.bf16.msra.mxu0 0
  %1372 = vmatprep.subr.bf16.mxu0 0
  %1373 = vmatpush1.bf16.msra.mxu0 0
  %1374 = vmatprep.subr.bf16.mxu0 0
  %1375 = vmatpush1.bf16.msra.mxu0 0
  %1376 = vmatprep.subr.bf16.mxu0 0
  %1377 = vmatpush1.bf16.msra.mxu0 0
  %1378 = vmatprep.mubr.bf16.mxu0 0
  %1379 = vmatmul.mubr.bf16.gmra.mrb[0].mxu0 %v833
  %v1380 = vpop.f32.mrb[0].mxu0
  %v1381 = vadd.f32 %v927, %v1380
  %v1382 = vpop.f32.mrb[0].mxu0
  %v1383 = vpop.f32.mrb[0].mxu0
  %v1384 = vpop.f32.mrb[0].mxu0
  %1385 = vdwg.mxu0
  %v1386 = vxor.u32 %v1258, 2147483648
  %v1387 = vxor.u32 %v1260, 2147483648
  %v1388 = vxor.u32 %v1299, 2147483648
  %v1389 = vxor.u32 %v1301, 2147483648
  %v1390 = vxor.u32 %v1340, 2147483648
  %v1391 = vxor.u32 %v1342, 2147483648
  %v1392 = vxor.u32 %v1381, 2147483648
  %v1393 = vmul.f32 %v1386, 1.442695
  %v1394 = vpow.pop %v1393
  %v1395 = vmul.f32 %v1387, 1.442695
  %v1396 = vpow.pop %v1395
  %v1397 = vmul.f32 %v1388, 1.442695
  %v1398 = vpow.pop %v1397
  %v1399 = vmul.f32 %v1389, 1.442695
  %v1400 = vpow.pop %v1399
  %v1401 = vmul.f32 %v1390, 1.442695
  %v1402 = vpow.pop %v1401
  %v1403 = vmul.f32 %v1391, 1.442695
  %v1404 = vpow.pop %v1403
  %v1405 = vmul.f32 %v1392, 1.442695
  %v1406 = vpow.pop %v1405
  %v1407 = vadd.f32 %v1394, 1.0
  %v1408 = vadd.f32 %v1396, 1.0
  %v1409 = vadd.f32 %v1398, 1.0
  %v1410 = vadd.f32 %v1400, 1.0
  %v1411 = vadd.f32 %v1402, 1.0
  %v1412 = vadd.f32 %v1404, 1.0
  %v1413 = vadd.f32 %v1406, 1.0
  %v1414 = vrcp.pop %v1407
  %v1415 = vmul.f32 1.0, %v1414
  %v1416 = vrcp.pop %v1408
  %v1417 = vmul.f32 1.0, %v1416
  %v1418 = vrcp.pop %v1409
  %v1419 = vmul.f32 1.0, %v1418
  %v1420 = vrcp.pop %v1410
  %v1421 = vmul.f32 1.0, %v1420
  %v1422 = vrcp.pop %v1411
  %v1423 = vmul.f32 1.0, %v1422
  %v1424 = vrcp.pop %v1412
  %v1425 = vmul.f32 1.0, %v1424
  %v1426 = vrcp.pop %v1413
  %v1427 = vmul.f32 1.0, %v1426
  %1428 = vst [vmem:[%s12] sm:$0xff] %v1415
  %1429 = vst [vmem:[%s12 + $0x8] sm:$0xff] %v1417
  %1430 = vst [vmem:[%s12 + $0x10] sm:$0xff] %v1419
  %1431 = vst [vmem:[%s12 + $0x18] sm:$0xff] %v1421
  %1432 = vst [vmem:[%s12 + $0x20] sm:$0xff] %v1423
  %1433 = vst [vmem:[%s12 + $0x28] sm:$0xff] %v1425
  %1434 = vst.msk [vmem:[%s12 + $0x30] sm:$0xff] %vm465, %v1427
  %v1435 = vsel %vm746, %v728, %v732
  %vm1436 = vcmask 64512
  %1437 = vst.msk [vmem:[%s13] sm:$0xff] %vm1436, %v1435
  // Predicated region
  $region50: #{cvae_forward.1} parent=0 // pred_check
    _
  $region51: #{cvae_forward.1} parent=0 // pred_check_branch
    %1439 = sbr.rel (0) target = $region53
  $region52: #{cvae_forward.1} parent=0 // pred_region
    _
  $region53: #{cvae_forward.1} parent=0 // pred_fallthru
    _
  // Predicated region
  $region54: #{cvae_forward.1} parent=0 // pred_check
    _
  $region55: #{cvae_forward.1} parent=0 // pred_check_branch
    %1441 = sbr.rel (0) target = $region57
  $region56: #{cvae_forward.1} parent=0 // pred_region
    _
  $region57: #{cvae_forward.1} parent=0 // pred_fallthru
    _
  // Predicated region
  $region58: #{cvae_forward.1} parent=0 // pred_check
    _
  $region59: #{cvae_forward.1} parent=0 // pred_check_branch
    %1443 = sbr.rel (0) target = $region61
  $region60: #{cvae_forward.1} parent=0 // pred_region
    _
  $region61: #{cvae_forward.1} parent=0 // pred_fallthru
    _
  // Predicated region
  $region62: #{cvae_forward.1} parent=0 // pred_check
    _
  $region63: #{cvae_forward.1} parent=0 // pred_check_branch
    %1445 = sbr.rel (0) target = $region65
  $region64: #{cvae_forward.1} parent=0 // pred_region
    _
  $region65: #{cvae_forward.1} parent=0 // pred_fallthru
    _

</llo_original>
